<compile_context>
chip_gen: v5e
topology: v5e:2x2
jax: 0.10.0
libtpu: 0.0.40
codegen_flags: <defaults>
</compile_context>

<pallas_src>
import jax
import jax.numpy as jnp
from jax import lax
from jax.experimental import pallas as pl
from jax.experimental.pallas import tpu as pltpu


def attention_kernel(enc_ref, hid_ref, we_ref, wdt_ref, bd_ref, out_ref,
                     wh_sc, m_sc, l_sc, acc_sc):
    # enc_ref: [TS, 2E]  per-(b, s-tile) encoder block (TS on sublanes, 2E on lanes)
    # hid_ref: [1, D]    decoder hidden state for batch row b
    # we_ref : [D, 2E]   linear_encoder weight, torch [out, in] layout
    # wdt_ref: [2E, D]   linear_decoder weight, pre-transposed
    # bd_ref : [1, D]
    # out_ref: [1, D]
    # scratch: wh_sc [1,2E], m_sc [1,1], l_sc [1,1], acc_sc [1,2E] (all f32)
    s = pl.program_id(1)

    @pl.when(s == 0)
    def _init():
        # Hoisted once per batch row (not per S tile):
        #   wh[b] = hid[b] @ W_enc   so   scores[b, s] = enc[b, s, :] . wh[b]
        # (never materializes the [B, S, D] projection of the reference code)
        wh_sc[...] = jnp.dot(hid_ref[...], we_ref[...],
                             preferred_element_type=jnp.float32)         # [1, 2E]
        m_sc[...] = jnp.full(m_sc.shape, -jnp.inf, jnp.float32)
        l_sc[...] = jnp.zeros(l_sc.shape, jnp.float32)
        acc_sc[...] = jnp.zeros(acc_sc.shape, jnp.float32)

    enc = enc_ref[...]                                                   # [TS, 2E]

    # Lane-dense scores [1, TS]: contract 2E with 2E (rhs-transposed dot on the
    # MXU) so the softmax max/sum are lane reductions and exp runs on full lanes.
    scores = lax.dot_general(wh_sc[...], enc, (((1,), (1,)), ((), ())),
                             preferred_element_type=jnp.float32)         # [1, TS]

    # Online (flash-style) softmax across the S grid axis; stats stay in f32.
    m_prev = m_sc[...]                                                   # [1, 1]
    m_new = jnp.maximum(m_prev, jnp.max(scores, axis=1, keepdims=True))  # [1, 1]
    alpha = jnp.exp(m_prev - m_new)                                      # [1, 1]
    p = jnp.exp(scores - m_new)                                          # [1, TS]
    l_sc[...] = alpha * l_sc[...] + jnp.sum(p, axis=1, keepdims=True)
    acc_sc[...] = alpha * acc_sc[...] + jnp.dot(
        p, enc, preferred_element_type=jnp.float32)                      # [1, 2E]
    m_sc[...] = m_new

    @pl.when(s == pl.num_programs(1) - 1)
    def _finalize():
        # Exact reciprocal (approx=False) so attention weights match the reference.
        context = acc_sc[...] * pl.reciprocal(l_sc[...], approx=False)   # [1, 2E]
        out = jnp.dot(context, wdt_ref[...],
                      preferred_element_type=jnp.float32) + bd_ref[...]  # [1, D]
        out_ref[...] = out.astype(out_ref.dtype)


def attention_forward(decoder_input, encoder_outputs, encoder_hidden_state,
                      w_enc, w_dec_t, b_dec, *, ts=None):
    """encoder_outputs: [S, B, 2E] (seq-first, like PyTorch).
       w_enc: [D, 2E] (torch [out, in] layout).  w_dec_t: [2E, D].  b_dec: [D]."""
    del decoder_input  # unused by the reference forward
    S, B, E2 = encoder_outputs.shape
    D = w_dec_t.shape[1]

    if ts is None:
        # Default S tile: fits comfortably inside v5e's 16 MiB scoped / v7x's
        # 64 MiB physical VMEM even with double buffering at realistic 2E.
        ts = S if S <= 512 else 512
    assert S % ts == 0, "TODO(synk): pad/mask the ragged final S tile"
    assert ts == S or ts % 8 == 0, "S tile must be a multiple of 8 sublanes"

    # One-time layout change so each per-b tile is [TS, 2E] (TS -> sublanes,
    # 2E -> lanes): dense DMA beats + dense vregs for the streaming pass.
    # TODO(synk): produce encoder_outputs batch-major upstream to skip this copy.
    enc_bse = jnp.transpose(encoder_outputs, (1, 0, 2))                  # [B, S, 2E]
    hid_b1d = encoder_hidden_state.reshape(B, 1, D)
    bd_2d = b_dec.reshape(1, D)

    grid = (B, S // ts)

    cost = pl.CostEstimate(
        flops=2 * B * (D * E2 + 2 * S * E2 + E2 * D),
        transcendentals=B * S,
        bytes_accessed=4 * (S * B * E2 + B * D + 2 * D * E2 + D + B * D),
    )

    out = pl.pallas_call(
        attention_kernel,
        out_shape=jax.ShapeDtypeStruct((B, 1, D), jnp.float32),
        grid_spec=pltpu.PrefetchScalarGridSpec(
            num_scalar_prefetch=0,
            grid=grid,
            in_specs=[
                # enc: per-b, S-tiled, full 2E on lanes
                pl.BlockSpec((pl.Squeezed(), ts, E2), lambda b, s: (b, s, 0)),
                # hidden state: per-b row, resident across the S loop
                pl.BlockSpec((pl.Squeezed(), 1, D), lambda b, s: (b, 0, 0)),
                # weights / bias: constant blocks, fetched once and kept in VMEM
                pl.BlockSpec((D, E2), lambda b, s: (0, 0)),
                pl.BlockSpec((E2, D), lambda b, s: (0, 0)),
                pl.BlockSpec((1, D), lambda b, s: (0, 0)),
            ],
            out_specs=pl.BlockSpec((pl.Squeezed(), 1, D), lambda b, s: (b, 0, 0)),
            scratch_shapes=[
                pltpu.VMEM((1, E2), jnp.float32),   # wh (hoisted hid @ W_enc)
                pltpu.VMEM((1, 1), jnp.float32),    # running max m
                pltpu.VMEM((1, 1), jnp.float32),    # running sum l
                pltpu.VMEM((1, E2), jnp.float32),   # context accumulator
            ],
        ),
        compiler_params=pltpu.CompilerParams(
            # batch axis shards across v7x's 2 TCs; the S axis carries the
            # online-softmax accumulator state so it must stay "arbitrary".
            dimension_semantics=("parallel", "arbitrary"),
            vmem_limit_bytes=32 * 1024 * 1024,      # safe on v5e/v6e/v7x
        ),
        cost_estimate=cost,
    )(enc_bse, hid_b1d, w_enc, w_dec_t, bd_2d)

    return out.reshape(B, D)


def attention_reference(encoder_outputs, encoder_hidden_state, w_enc, w_dec_t, b_dec):
    enc = jnp.transpose(encoder_outputs, (1, 0, 2))                      # [B, S, 2E]
    proj = jnp.einsum('bse,de->bsd', enc, w_enc)                         # [B, S, D]
    scores = jnp.einsum('bsd,bd->bs', proj, encoder_hidden_state)        # [B, S]
    attn = jax.nn.softmax(scores, axis=1)                                # [B, S]
    context = jnp.einsum('bs,bse->be', attn, enc)                        # [B, 2E]
    return context @ w_dec_t + b_dec[None, :]                            # [B, D]


if __name__ == "__main__":
    # Small shapes consistent with the module:
    #   encoder_hidden_dim = 16  -> 2*Eh = 32
    #   decoder_hidden_dim = 32
    #   batch = 2, src_len = 16 (two S tiles of 8 to exercise the online softmax)
    B, S = 2, 16
    enc_hid, dec_hid = 16, 32
    E2 = 2 * enc_hid

    key = jax.random.PRNGKey(0)
    k1, k2, k3, k4, k5, k6 = jax.random.split(key, 6)

    # Parameters (deterministic init). PyTorch Linear weight is [out, in].
    # Encoder weight kept in torch layout [D, 2E] (used as hid @ W_enc);
    # decoder weight passed pre-transposed [2E, D].
    w_enc = jax.random.normal(k1, (dec_hid, E2), jnp.float32) * 0.1
    w_dec_t = jax.random.normal(k2, (E2, dec_hid), jnp.float32) * 0.1
    b_dec = jax.random.normal(k3, (dec_hid,), jnp.float32) * 0.1

    # Inputs
    decoder_input = jax.random.normal(k4, (B, dec_hid), jnp.float32)     # unused by forward
    encoder_outputs = jax.random.normal(k5, (S, B, E2), jnp.float32)     # seq-first, like torch
    encoder_hidden_state = jax.random.normal(k6, (B, dec_hid), jnp.float32)

    # ts=8 < S so the multi-tile online-softmax accumulator path is exercised.
    out = attention_forward(decoder_input, encoder_outputs, encoder_hidden_state,
                            w_enc, w_dec_t, b_dec, ts=8)
    out = jax.block_until_ready(out)

    ref = attention_reference(encoder_outputs, encoder_hidden_state,
                              w_enc, w_dec_t, b_dec)
    assert out.shape == (B, dec_hid)
    # MXU default-precision f32 matmuls + online vs. direct softmax -> small tolerance
    assert jnp.allclose(out, ref, atol=2e-3, rtol=2e-3), "mismatch vs JAX reference"

    print("KERNEL_OK")
</pallas_src>

<mosaic_0001>
module attributes {stable_mosaic.version = 11 : i64} {
  func.func @attention_kernel(%arg0: i32, %arg1: i32, %arg2: memref<1x8x32xf32, #tpu.memory_space<vmem>>, %arg3: memref<1x1x32xf32, #tpu.memory_space<vmem>>, %arg4: memref<32x32xf32, #tpu.memory_space<vmem>>, %arg5: memref<32x32xf32, #tpu.memory_space<vmem>>, %arg6: memref<1x32xf32, #tpu.memory_space<vmem>>, %arg7: memref<1x1x32xf32, #tpu.memory_space<vmem>>, %arg8: memref<1x32xf32, #tpu.memory_space<vmem>>, %arg9: memref<1x1xf32, #tpu.memory_space<vmem>>, %arg10: memref<1x1xf32, #tpu.memory_space<vmem>>, %arg11: memref<1x32xf32, #tpu.memory_space<vmem>>) attributes {dimension_semantics = [#tpu.dimension_semantics<parallel>, #tpu.dimension_semantics<arbitrary>], iteration_bounds = array<i64: 2, 2>, scalar_prefetch = 0 : i64, scratch_operands = 4 : i64, tpu.core_type = #tpu.core_type<tc>, window_params = [{transform_indices = @transform_0, window_bounds = array<i64: 1, 8, 32>}, {transform_indices = @transform_1, window_bounds = array<i64: 1, 1, 32>}, {pipeline_mode = #tpu.pipeline_mode<synchronous>, transform_indices = @transform_2, window_bounds = array<i64: 32, 32>}, {pipeline_mode = #tpu.pipeline_mode<synchronous>, transform_indices = @transform_3, window_bounds = array<i64: 32, 32>}, {pipeline_mode = #tpu.pipeline_mode<synchronous>, transform_indices = @transform_4, window_bounds = array<i64: 1, 32>}, {transform_indices = @transform_5, window_bounds = array<i64: 1, 1, 32>}]} {
    %c0_i32 = arith.constant 0 : i32
    %0 = arith.cmpi eq, %arg1, %c0_i32 : i32
    %1 = arith.extui %0 : i1 to i32
    %c0_i32_0 = arith.constant 0 : i32
    %2 = arith.cmpi ne, %1, %c0_i32_0 : i32
    scf.if %2 {
      %c0_21 = arith.constant 0 : index
      %c0_22 = arith.constant 0 : index
      %c0_23 = arith.constant 0 : index
      %32 = vector.load %arg3[%c0_21, %c0_22, %c0_23] : memref<1x1x32xf32, #tpu.memory_space<vmem>>, vector<1x1x32xf32>
      %33 = vector.shape_cast %32 : vector<1x1x32xf32> to vector<1x32xf32>
      %c0_24 = arith.constant 0 : index
      %c0_25 = arith.constant 0 : index
      %34 = vector.load %arg4[%c0_24, %c0_25] : memref<32x32xf32, #tpu.memory_space<vmem>>, vector<32x32xf32>
      %cst_26 = arith.constant dense<0.000000e+00> : vector<1x32xf32>
      %35 = tpu.matmul %33, %34, %cst_26 {dimension_numbers = #tpu.dot_dimension_numbers<[1], [0], [0], [1], [0, 0, 1, 1], [], []>} : vector<1x32xf32>, vector<32x32xf32>, vector<1x32xf32> -> vector<1x32xf32>
      %c0_27 = arith.constant 0 : index
      %c0_28 = arith.constant 0 : index
      %36 = vector.load %arg8[%c0_27, %c0_28] : memref<1x32xf32, #tpu.memory_space<vmem>>, vector<1x32xf32>
      tpu.vector_store %arg8[%c0_27, %c0_28], %35 {strides = array<i32>} : memref<1x32xf32, #tpu.memory_space<vmem>>, vector<1x32xf32>,
      %cst_29 = arith.constant 0xFF800000 : f32
      %37 = vector.broadcast %cst_29 : f32 to vector<1x1xf32>
      %c0_30 = arith.constant 0 : index
      %c0_31 = arith.constant 0 : index
      %38 = vector.load %arg9[%c0_30, %c0_31] : memref<1x1xf32, #tpu.memory_space<vmem>>, vector<1x1xf32>
      tpu.vector_store %arg9[%c0_30, %c0_31], %37 {strides = array<i32>} : memref<1x1xf32, #tpu.memory_space<vmem>>, vector<1x1xf32>,
      %cst_32 = arith.constant 0.000000e+00 : f32
      %39 = vector.broadcast %cst_32 : f32 to vector<1x1xf32>
      %c0_33 = arith.constant 0 : index
      %c0_34 = arith.constant 0 : index
      %40 = vector.load %arg10[%c0_33, %c0_34] : memref<1x1xf32, #tpu.memory_space<vmem>>, vector<1x1xf32>
      tpu.vector_store %arg10[%c0_33, %c0_34], %39 {strides = array<i32>} : memref<1x1xf32, #tpu.memory_space<vmem>>, vector<1x1xf32>,
      %cst_35 = arith.constant 0.000000e+00 : f32
      %41 = vector.broadcast %cst_35 : f32 to vector<1x32xf32>
      %c0_36 = arith.constant 0 : index
      %c0_37 = arith.constant 0 : index
      %42 = vector.load %arg11[%c0_36, %c0_37] : memref<1x32xf32, #tpu.memory_space<vmem>>, vector<1x32xf32>
      tpu.vector_store %arg11[%c0_36, %c0_37], %41 {strides = array<i32>} : memref<1x32xf32, #tpu.memory_space<vmem>>, vector<1x32xf32>,
    } else {
    }
    %c0 = arith.constant 0 : index
    %c0_1 = arith.constant 0 : index
    %c0_2 = arith.constant 0 : index
    %3 = vector.load %arg2[%c0, %c0_1, %c0_2] : memref<1x8x32xf32, #tpu.memory_space<vmem>>, vector<1x8x32xf32>
    %4 = vector.shape_cast %3 : vector<1x8x32xf32> to vector<8x32xf32>
    %c0_3 = arith.constant 0 : index
    %c0_4 = arith.constant 0 : index
    %5 = vector.load %arg8[%c0_3, %c0_4] : memref<1x32xf32, #tpu.memory_space<vmem>>, vector<1x32xf32>
    %cst = arith.constant dense<0.000000e+00> : vector<1x8xf32>
    %6 = tpu.matmul %5, %4, %cst {dimension_numbers = #tpu.dot_dimension_numbers<[1], [1], [0], [0], [0, 0, 1, 0], [], []>} : vector<1x32xf32>, vector<8x32xf32>, vector<1x8xf32> -> vector<1x8xf32>
    %c0_5 = arith.constant 0 : index
    %c0_6 = arith.constant 0 : index
    %7 = vector.load %arg9[%c0_5, %c0_6] : memref<1x1xf32, #tpu.memory_space<vmem>>, vector<1x1xf32>
    %cst_7 = arith.constant dense<0xFF800000> : vector<1xf32>
    %8 = vector.multi_reduction <maximumf>, %6, %cst_7 [1] : vector<1x8xf32> to vector<1xf32>
    %9 = vector.shape_cast %8 : vector<1xf32> to vector<1x1xf32>
    %10 = arith.maximumf %7, %9 : vector<1x1xf32>
    %11 = arith.subf %7, %10 : vector<1x1xf32>
    %12 = math.exp %11 : vector<1x1xf32>
    %13 = vector.broadcast %10 : vector<1x1xf32> to vector<1x8xf32>
    %14 = arith.subf %6, %13 : vector<1x8xf32>
    %15 = math.exp %14 : vector<1x8xf32>
    %c0_8 = arith.constant 0 : index
    %c0_9 = arith.constant 0 : index
    %16 = vector.load %arg10[%c0_8, %c0_9] : memref<1x1xf32, #tpu.memory_space<vmem>>, vector<1x1xf32>
    %17 = arith.mulf %12, %16 : vector<1x1xf32>
    %cst_10 = arith.constant dense<0.000000e+00> : vector<1xf32>
    %18 = vector.multi_reduction <add>, %15, %cst_10 [1] : vector<1x8xf32> to vector<1xf32>
    %19 = vector.shape_cast %18 : vector<1xf32> to vector<1x1xf32>
    %20 = arith.addf %17, %19 : vector<1x1xf32>
    %c0_11 = arith.constant 0 : index
    %c0_12 = arith.constant 0 : index
    %21 = vector.load %arg10[%c0_11, %c0_12] : memref<1x1xf32, #tpu.memory_space<vmem>>, vector<1x1xf32>
    tpu.vector_store %arg10[%c0_11, %c0_12], %20 {strides = array<i32>} : memref<1x1xf32, #tpu.memory_space<vmem>>, vector<1x1xf32>,
    %c0_13 = arith.constant 0 : index
    %c0_14 = arith.constant 0 : index
    %22 = vector.load %arg11[%c0_13, %c0_14] : memref<1x32xf32, #tpu.memory_space<vmem>>, vector<1x32xf32>
    %23 = vector.broadcast %12 : vector<1x1xf32> to vector<1x32xf32>
    %24 = arith.mulf %23, %22 : vector<1x32xf32>
    %cst_15 = arith.constant dense<0.000000e+00> : vector<1x32xf32>
    %25 = tpu.matmul %15, %4, %cst_15 {dimension_numbers = #tpu.dot_dimension_numbers<[1], [0], [0], [1], [0, 0, 1, 1], [], []>} : vector<1x8xf32>, vector<8x32xf32>, vector<1x32xf32> -> vector<1x32xf32>
    %26 = arith.addf %24, %25 : vector<1x32xf32>
    %c0_16 = arith.constant 0 : index
    %c0_17 = arith.constant 0 : index
    %27 = vector.load %arg11[%c0_16, %c0_17] : memref<1x32xf32, #tpu.memory_space<vmem>>, vector<1x32xf32>
    tpu.vector_store %arg11[%c0_16, %c0_17], %26 {strides = array<i32>} : memref<1x32xf32, #tpu.memory_space<vmem>>, vector<1x32xf32>,
    %c0_18 = arith.constant 0 : index
    %c0_19 = arith.constant 0 : index
    %28 = vector.load %arg9[%c0_18, %c0_19] : memref<1x1xf32, #tpu.memory_space<vmem>>, vector<1x1xf32>
    tpu.vector_store %arg9[%c0_18, %c0_19], %10 {strides = array<i32>} : memref<1x1xf32, #tpu.memory_space<vmem>>, vector<1x1xf32>,
    %c1_i32 = arith.constant 1 : i32
    %29 = arith.cmpi eq, %arg1, %c1_i32 : i32
    %30 = arith.extui %29 : i1 to i32
    %c0_i32_20 = arith.constant 0 : i32
    %31 = arith.cmpi ne, %30, %c0_i32_20 : i32
    scf.if %31 {
      %c0_21 = arith.constant 0 : index
      %c0_22 = arith.constant 0 : index
      %32 = vector.load %arg11[%c0_21, %c0_22] : memref<1x32xf32, #tpu.memory_space<vmem>>, vector<1x32xf32>
      %c0_23 = arith.constant 0 : index
      %c0_24 = arith.constant 0 : index
      %33 = vector.load %arg10[%c0_23, %c0_24] : memref<1x1xf32, #tpu.memory_space<vmem>>, vector<1x1xf32>
      %34 = tpu.reciprocal %33 : vector<1x1xf32> -> vector<1x1xf32>
      %35 = vector.broadcast %34 : vector<1x1xf32> to vector<1x32xf32>
      %36 = arith.mulf %32, %35 : vector<1x32xf32>
      %c0_25 = arith.constant 0 : index
      %c0_26 = arith.constant 0 : index
      %37 = vector.load %arg5[%c0_25, %c0_26] : memref<32x32xf32, #tpu.memory_space<vmem>>, vector<32x32xf32>
      %cst_27 = arith.constant dense<0.000000e+00> : vector<1x32xf32>
      %38 = tpu.matmul %36, %37, %cst_27 {dimension_numbers = #tpu.dot_dimension_numbers<[1], [0], [0], [1], [0, 0, 1, 1], [], []>} : vector<1x32xf32>, vector<32x32xf32>, vector<1x32xf32> -> vector<1x32xf32>
      %c0_28 = arith.constant 0 : index
      %c0_29 = arith.constant 0 : index
      %39 = vector.load %arg6[%c0_28, %c0_29] : memref<1x32xf32, #tpu.memory_space<vmem>>, vector<1x32xf32>
      %40 = arith.addf %38, %39 : vector<1x32xf32>
      %c0_30 = arith.constant 0 : index
      %c0_31 = arith.constant 0 : index
      %c0_32 = arith.constant 0 : index
      %41 = vector.load %arg7[%c0_30, %c0_31, %c0_32] : memref<1x1x32xf32, #tpu.memory_space<vmem>>, vector<1x1x32xf32>
      %42 = vector.shape_cast %41 : vector<1x1x32xf32> to vector<1x32xf32>
      %43 = vector.shape_cast %40 : vector<1x32xf32> to vector<1x1x32xf32>
      tpu.vector_store %arg7[%c0_30, %c0_31, %c0_32], %43 {strides = array<i32>} : memref<1x1x32xf32, #tpu.memory_space<vmem>>, vector<1x1x32xf32>,
    } else {
    }
    return
  }
  func.func @transform_0(%arg0: i32, %arg1: i32) -> (i32, i32, i32) {
    %c0_i32 = arith.constant 0 : i32
    %c0_i32_0 = arith.constant 0 : i32
    return %arg0, %arg1, %c0_i32 : i32, i32, i32
  }
  func.func @transform_1(%arg0: i32, %arg1: i32) -> (i32, i32, i32) {
    %c0_i32 = arith.constant 0 : i32
    %c0_i32_0 = arith.constant 0 : i32
    %c0_i32_1 = arith.constant 0 : i32
    return %arg0, %c0_i32, %c0_i32_0 : i32, i32, i32
  }
  func.func @transform_2(%arg0: i32, %arg1: i32) -> (i32, i32) {
    %c0_i32 = arith.constant 0 : i32
    %c0_i32_0 = arith.constant 0 : i32
    %c0_i32_1 = arith.constant 0 : i32
    return %c0_i32, %c0_i32_0 : i32, i32
  }
  func.func @transform_3(%arg0: i32, %arg1: i32) -> (i32, i32) {
    %c0_i32 = arith.constant 0 : i32
    %c0_i32_0 = arith.constant 0 : i32
    %c0_i32_1 = arith.constant 0 : i32
    return %c0_i32, %c0_i32_0 : i32, i32
  }
  func.func @transform_4(%arg0: i32, %arg1: i32) -> (i32, i32) {
    %c0_i32 = arith.constant 0 : i32
    %c0_i32_0 = arith.constant 0 : i32
    %c0_i32_1 = arith.constant 0 : i32
    return %c0_i32, %c0_i32_0 : i32, i32
  }
  func.func @transform_5(%arg0: i32, %arg1: i32) -> (i32, i32, i32) {
    %c0_i32 = arith.constant 0 : i32
    %c0_i32_0 = arith.constant 0 : i32
    %c0_i32_1 = arith.constant 0 : i32
    return %arg0, %c0_i32, %c0_i32_0 : i32, i32, i32
  }
}

</mosaic_0001>

<llo_original>
// kernel: tpu_custom_call.1
$region0: #{tpu_custom_call.1}
  #allocation0 [shape = 'u32[]', space=smem, size = 0x4, offset = 0x4, fixed_abs, tag = 'smem constant byte address 0x4 - core index']
  #allocation1 [shape = 'u32[72,128]{1,0:T(1,128)}', space=vmem, size = 0x9000, scoped, tag = 'internal scratch']
  #allocation2 [shape = 'f32[1,32]{1,0:T(1,128)}', space=vmem, size = 0x200, scoped, tag = 'scratch operand']
  #allocation3 [shape = 'f32[1,1]{1,0:T(1,128)}', space=vmem, size = 0x200, scoped, tag = 'scratch operand']
  #allocation4 [shape = 'f32[1,1]{1,0:T(1,128)}', space=vmem, size = 0x200, scoped, tag = 'scratch operand']
  #allocation5 [shape = 'f32[1,32]{1,0:T(1,128)}', space=vmem, size = 0x200, scoped, tag = 'scratch operand']
  %s0 = inlined_call_operand.hbm [shape: f32[2,16,32], index: 0, kind: input, shape index: {}]
  %s1 = inlined_call_operand.hbm [shape: f32[2,1,32], index: 1, kind: input, shape index: {}]
  %s2 = inlined_call_operand.hbm [shape: f32[32,32], index: 2, kind: input, shape index: {}]
  %s3 = inlined_call_operand.hbm [shape: f32[32,32], index: 3, kind: input, shape index: {}]
  %s4 = inlined_call_operand.vmem [shape: f32[1,32], index: 4, kind: input, shape index: {}]
  %s5 = inlined_call_operand.hbm [shape: f32[2,1,32], index: 5, kind: output, shape index: {}]
  %s6 = sld [smem:[#allocation0]]
  $region77: #{tpu_custom_call.1} parent=0
    _
  %s8 = ssub.s32 1, %s6
  %s9 = scalar_select 0, %s8, %s6
  $region1: #{tpu_custom_call.1} parent=0
    #allocation6 [shape = 'u8[8192]{0}', space=vmem, size = 0x2000, scoped, tag = 'input window, operand 0']
    #allocation7 [shape = 's32[2]{0}', space=sflag, size = 0x8, scoped, tag = 'scoped memory for tpu_custom_call.1']
    #allocation8 [shape = 's32[2]{0}', space=sflag, size = 0x8, scoped, tag = 'scoped memory for tpu_custom_call.1']
    #allocation9 [shape = 'u8[1024]{0}', space=vmem, size = 0x400, scoped, tag = 'input window, operand 1']
    #allocation10 [shape = 's32[2]{0}', space=sflag, size = 0x8, scoped, tag = 'scoped memory for tpu_custom_call.1']
    #allocation11 [shape = 'u8[16384]{0}', space=vmem, size = 0x4000, scoped, tag = 'input window, operand 2, single buffered']
    #allocation12 [shape = 'u8[16384]{0}', space=vmem, size = 0x4000, scoped, tag = 'input window, operand 3, single buffered']
    #allocation13 [shape = 's32[1]{0}', space=sflag, size = 0x4, scoped, tag = 'scoped memory for tpu_custom_call.1']
    #allocation14 [shape = 'u8[1024]{0}', space=vmem, size = 0x400, scoped, tag = 'output window, operand 0']
    %10 = vsyncpa [#allocation7], 0
    %s11 = scalar_lea.sflag [#allocation7], 1
    %12 = vsyncpa %s11, 0
    %13 = vsyncpa [#allocation10], 0
    %s14 = scalar_lea.sflag [#allocation10], 1
    %15 = vsyncpa %s14, 0
    %16 = vsyncpa [#allocation13], 0
    %17 = vsyncpa [#allocation8], 0
    %s18 = scalar_lea.sflag [#allocation8], 1
    %19 = vsyncpa %s18, 0
    loop: start=0, step=1, limit=6
    $region2: #{tpu_custom_call.1} parent=1 // loop_pre_header
      _
    $region3: #{tpu_custom_call.1} parent=1 // loop_header
      %s21 = sphi 0, %s25
      %p22 = scmp.ge.s32.totalorder %s21, 6
      %s28 = sphi 0, %s40
      %s29 = sphi 0, %s36
      %s30 = sphi 0, %s28
      %s31 = sphi 0, %s29
      %s32 = sphi 0, %s30
      %s33 = sphi 0, %s31
      %s45 = sphi 0, %s47
      %s48 = sphi 0, %s45
      %s49 = sphi 0, %s48
      %s65 = sphi 0, %s49
      %s71 = sphi 0, %s73
      %s74 = sphi 0, %s71
      %s75 = sphi 0, %s74
      %s91 = sphi 0, %s75
      %s95 = sphi 0, %s95
      %s97 = sphi 0, %s95
      %s98 = sphi 0, %s97
      %s112 = sphi 0, %s98
      %s116 = sphi 0, %s116
      %s118 = sphi 0, %s116
      %s119 = sphi 0, %s118
      %s133 = sphi 0, %s119
      %s137 = sphi 0, %s137
      %s139 = sphi 0, %s137
      %s140 = sphi 0, %s139
      %s154 = sphi 0, %s140
      %s160 = sphi 0, %s162
      %s163 = sphi 0, %s160
      %s164 = sphi 0, %s163
      %s180 = sphi 0, %s164
    $region4: #{tpu_custom_call.1} parent=1 // loop_header_branch
      %24 = sbr.rel (%p22) target = $region8
    $region5: #{tpu_custom_call.1} parent=1 // loop_body
      %s26 = ssub.s32 %s21, 1
      %s27 = ssub.s32 %s21, 2
      %s34 = sadd.s32 1, %s29
      %p35 = scmp.ge.s32.totalorder %s34, 2
      %s36 = scalar_select %p35, 0, %s34
      %s37 = sadd.s32 1, %s28
      %s38 = scalar_select %p35, %s37, %s28
      %p39 = scmp.ge.s32.totalorder %s38, 2
      %s40 = scalar_select %p39, 0, %s38
      %s41 = ssub.s32 %s28, %s40
      %s42 = ssub.s32 %s29, %s36
      %s43 = sor.u32 %s41, %s42
      %p44 = scmp.eq.s32.totalorder %s43, 0
      %s46 = sadd.s32 %s45, 1
      %s47 = scalar_select %p44, %s45, %s46
      %p50 = pneg %p44
      %p51 = scmp.eq.s32.totalorder %s21, 3
      %p52 = por %p50, %p51
      %p53 = scmp.ne.s32.totalorder %s45, %s48
      %p54 = scmp.eq.s32.totalorder %s21, 0
      %p55 = por %p53, %p54
      %p56 = scmp.ne.s32.totalorder %s45, %s48
      %p57 = scmp.eq.s32.totalorder %s26, 3
      %p58 = por %p56, %p57
      %p59 = scmp.ne.s32.totalorder %s48, %s49
      %p60 = scmp.eq.s32.totalorder %s26, 0
      %p61 = por %p59, %p60
      %p62 = scmp.ne.s32.totalorder %s48, %s49
      %p63 = scmp.eq.s32.totalorder %s27, 3
      %p64 = por %p62, %p63
      %p66 = scmp.ne.s32.totalorder %s49, %s65
      %p67 = scmp.eq.s32.totalorder %s27, 0
      %p68 = por %p66, %p67
      %s69 = ssub.s32 %s28, %s40
      %p70 = scmp.eq.s32.totalorder %s69, 0
      %s72 = sadd.s32 %s71, 1
      %s73 = scalar_select %p70, %s71, %s72
      %p76 = pneg %p70
      %p77 = scmp.eq.s32.totalorder %s21, 3
      %p78 = por %p76, %p77
      %p79 = scmp.ne.s32.totalorder %s71, %s74
      %p80 = scmp.eq.s32.totalorder %s21, 0
      %p81 = por %p79, %p80
      %p82 = scmp.ne.s32.totalorder %s71, %s74
      %p83 = scmp.eq.s32.totalorder %s26, 3
      %p84 = por %p82, %p83
      %p85 = scmp.ne.s32.totalorder %s74, %s75
      %p86 = scmp.eq.s32.totalorder %s26, 0
      %p87 = por %p85, %p86
      %p88 = scmp.ne.s32.totalorder %s74, %s75
      %p89 = scmp.eq.s32.totalorder %s27, 3
      %p90 = por %p88, %p89
      %p92 = scmp.ne.s32.totalorder %s75, %s91
      %p93 = scmp.eq.s32.totalorder %s27, 0
      %p94 = por %p92, %p93
      %s96 = sadd.s32 %s95, 1
      %p99 = scmp.eq.s32.totalorder %s21, 3
      %p100 = scmp.ne.s32.totalorder %s95, %s97
      %p101 = scmp.eq.s32.totalorder %s21, 0
      %p102 = por %p100, %p101
      %p103 = scmp.ne.s32.totalorder %s95, %s97
      %p104 = scmp.eq.s32.totalorder %s26, 3
      %p105 = por %p103, %p104
      %p106 = scmp.ne.s32.totalorder %s97, %s98
      %p107 = scmp.eq.s32.totalorder %s26, 0
      %p108 = por %p106, %p107
      %p109 = scmp.ne.s32.totalorder %s97, %s98
      %p110 = scmp.eq.s32.totalorder %s27, 3
      %p111 = por %p109, %p110
      %p113 = scmp.ne.s32.totalorder %s98, %s112
      %p114 = scmp.eq.s32.totalorder %s27, 0
      %p115 = por %p113, %p114
      %s117 = sadd.s32 %s116, 1
      %p120 = scmp.eq.s32.totalorder %s21, 3
      %p121 = scmp.ne.s32.totalorder %s116, %s118
      %p122 = scmp.eq.s32.totalorder %s21, 0
      %p123 = por %p121, %p122
      %p124 = scmp.ne.s32.totalorder %s116, %s118
      %p125 = scmp.eq.s32.totalorder %s26, 3
      %p126 = por %p124, %p125
      %p127 = scmp.ne.s32.totalorder %s118, %s119
      %p128 = scmp.eq.s32.totalorder %s26, 0
      %p129 = por %p127, %p128
      %p130 = scmp.ne.s32.totalorder %s118, %s119
      %p131 = scmp.eq.s32.totalorder %s27, 3
      %p132 = por %p130, %p131
      %p134 = scmp.ne.s32.totalorder %s119, %s133
      %p135 = scmp.eq.s32.totalorder %s27, 0
      %p136 = por %p134, %p135
      %s138 = sadd.s32 %s137, 1
      %p141 = scmp.eq.s32.totalorder %s21, 3
      %p142 = scmp.ne.s32.totalorder %s137, %s139
      %p143 = scmp.eq.s32.totalorder %s21, 0
      %p144 = por %p142, %p143
      %p145 = scmp.ne.s32.totalorder %s137, %s139
      %p146 = scmp.eq.s32.totalorder %s26, 3
      %p147 = por %p145, %p146
      %p148 = scmp.ne.s32.totalorder %s139, %s140
      %p149 = scmp.eq.s32.totalorder %s26, 0
      %p150 = por %p148, %p149
      %p151 = scmp.ne.s32.totalorder %s139, %s140
      %p152 = scmp.eq.s32.totalorder %s27, 3
      %p153 = por %p151, %p152
      %p155 = scmp.ne.s32.totalorder %s140, %s154
      %p156 = scmp.eq.s32.totalorder %s27, 0
      %p157 = por %p155, %p156
      %s158 = ssub.s32 %s28, %s40
      %p159 = scmp.eq.s32.totalorder %s158, 0
      %s161 = sadd.s32 %s160, 1
      %s162 = scalar_select %p159, %s160, %s161
      %p165 = pneg %p159
      %p166 = scmp.eq.s32.totalorder %s21, 3
      %p167 = por %p165, %p166
      %p168 = scmp.ne.s32.totalorder %s160, %s163
      %p169 = scmp.eq.s32.totalorder %s21, 0
      %p170 = por %p168, %p169
      %p171 = scmp.ne.s32.totalorder %s160, %s163
      %p172 = scmp.eq.s32.totalorder %s26, 3
      %p173 = por %p171, %p172
      %p174 = scmp.ne.s32.totalorder %s163, %s164
      %p175 = scmp.eq.s32.totalorder %s26, 0
      %p176 = por %p174, %p175
      %p177 = scmp.ne.s32.totalorder %s163, %s164
      %p178 = scmp.eq.s32.totalorder %s27, 3
      %p179 = por %p177, %p178
      %p181 = scmp.ne.s32.totalorder %s164, %s180
      %p182 = scmp.eq.s32.totalorder %s27, 0
      %p183 = por %p181, %p182
      %p184 = scmp.le.s32.totalorder 1, %s21
      %p185 = scmp.lt.s32.totalorder %s21, 5
      %p186 = pnand %p184, %p185
      %p187 = pneg %p186
      // Predicated region
      $region9: #{tpu_custom_call.1} parent=5 // pred_check
        _
      $region10: #{tpu_custom_call.1} parent=5 // pred_check_branch
        %189 = sbr.rel (%p186) target = $region12
      $region11: #{tpu_custom_call.1} parent=5 // pred_region
        %s190 = ssub.s32 %s21, 1
        // Predicated region
        $region13: #{tpu_custom_call.1} parent=11 // pred_check
          %p191 = pneg %p108
        $region14: #{tpu_custom_call.1} parent=11 // pred_check_branch
          %193 = sbr.rel (%p191) target = $region16
        $region15: #{tpu_custom_call.1} parent=11 // pred_region
          %195 = vsyncadd [#allocation10], 0
          %s196 = sshll.u32 %s2, 4
          %s197 = int_to_ptr.hbm [resolvable:$true] %s196
          %s198 = sshll.u32 [#allocation11], 4
          %s199 = int_to_ptr.vmem [resolvable:$true] %s198
          %204 = dma.hbm_to_vmem [thread:$0]  %s197, 512, %s199, [#allocation10], 128, 128, 8
        $region16: #{tpu_custom_call.1} parent=11 // pred_fallthru
          _
        // Predicated region
        $region17: #{tpu_custom_call.1} parent=11 // pred_check
          %p205 = pneg %p129
        $region18: #{tpu_custom_call.1} parent=11 // pred_check_branch
          %207 = sbr.rel (%p205) target = $region20
        $region19: #{tpu_custom_call.1} parent=11 // pred_region
          %209 = vsyncadd [#allocation13], 0
          %s210 = sshll.u32 %s3, 4
          %s211 = int_to_ptr.hbm [resolvable:$true] %s210
          %s212 = sshll.u32 [#allocation12], 4
          %s213 = int_to_ptr.vmem [resolvable:$true] %s212
          %218 = dma.hbm_to_vmem [thread:$0]  %s211, 512, %s213, [#allocation13], 128, 128, 8
        $region20: #{tpu_custom_call.1} parent=11 // pred_fallthru
          _
        // Predicated region
        $region21: #{tpu_custom_call.1} parent=11 // pred_check
          %p219 = pneg %p150
        $region22: #{tpu_custom_call.1} parent=11 // pred_check_branch
          %221 = sbr.rel (%p219) target = $region24
        $region23: #{tpu_custom_call.1} parent=11 // pred_region
          _
        $region24: #{tpu_custom_call.1} parent=11 // pred_fallthru
          _
      $region12: #{tpu_custom_call.1} parent=5 // pred_fallthru
        _
      %p222 = scmp.lt.s32.totalorder %s21, 4
      // Predicated region
      $region25: #{tpu_custom_call.1} parent=5 // pred_check
        %p223 = pneg %p222
      $region26: #{tpu_custom_call.1} parent=5 // pred_check_branch
        %225 = sbr.rel (%p223) target = $region28
      $region27: #{tpu_custom_call.1} parent=5 // pred_region
        // Predicated region
        $region29: #{tpu_custom_call.1} parent=27 // pred_check
          %p226 = pneg %p55
        $region30: #{tpu_custom_call.1} parent=27 // pred_check_branch
          %228 = sbr.rel (%p226) target = $region32
        $region31: #{tpu_custom_call.1} parent=27 // pred_region
          %s229 = sand.u32 %s45, 1
          %s230 = scalar_lea.sflag [#allocation7], %s229
          %s231 = sand.u32 %s45, 1
          %s232 = smul.addr %s231, 8
          %s233 = scalar_lea.vmem [#allocation6], %s232
          %235 = vsyncadd %s230, 0
          %s236 = smul.addr %s28, 2
          %s237 = sadd.s32 %s29, %s236
          %s238 = smul.addr %s237, 8
          %s239 = scalar_lea.hbm %s0, %s238
          %s241 = sshll.u32 %s239, 4
          %s242 = int_to_ptr.hbm [resolvable:$true] %s241
          %s243 = sshll.u32 %s233, 4
          %s244 = int_to_ptr.vmem [resolvable:$true] %s243
          %246 = dma.hbm_to_vmem [thread:$0]  %s242, 128, %s244, %s230
        $region32: #{tpu_custom_call.1} parent=27 // pred_fallthru
          _
        // Predicated region
        $region33: #{tpu_custom_call.1} parent=27 // pred_check
          %p247 = pneg %p81
        $region34: #{tpu_custom_call.1} parent=27 // pred_check_branch
          %249 = sbr.rel (%p247) target = $region36
        $region35: #{tpu_custom_call.1} parent=27 // pred_region
          %s250 = sand.u32 %s21, 1
          %s251 = scalar_lea.sflag [#allocation10], %s250
          %s252 = sand.u32 %s71, 1
          %s253 = scalar_lea.vmem [#allocation9], %s252
          %255 = vsyncadd %s251, 0
          %s256 = scalar_lea.hbm %s1, %s28
          %s258 = sshll.u32 %s256, 4
          %s259 = int_to_ptr.hbm [resolvable:$true] %s258
          %s260 = sshll.u32 %s253, 4
          %s261 = int_to_ptr.vmem [resolvable:$true] %s260
          %263 = dma.hbm_to_vmem [thread:$0]  %s259, 16, %s261, %s251
        $region36: #{tpu_custom_call.1} parent=27 // pred_fallthru
          _
      $region28: #{tpu_custom_call.1} parent=5 // pred_fallthru
        _
      %p264 = scmp.le.s32.totalorder 1, %s21
      %p265 = scmp.lt.s32.totalorder %s21, 5
      %p266 = pnand %p264, %p265
      %p267 = pneg %p266
      // Predicated region
      $region37: #{tpu_custom_call.1} parent=5 // pred_check
        _
      $region38: #{tpu_custom_call.1} parent=5 // pred_check_branch
        %269 = sbr.rel (%p266) target = $region40
      $region39: #{tpu_custom_call.1} parent=5 // pred_region
        %s270 = ssub.s32 %s21, 1
        %s271 = sand.u32 %s48, 1
        %s272 = scalar_lea.sflag [#allocation7], %s271
        %s273 = sand.u32 %s48, 1
        %s274 = smul.addr %s273, 8
        %s275 = scalar_lea.vmem [#allocation6], %s274
        // Predicated region
        $region41: #{tpu_custom_call.1} parent=39 // pred_check
          %p276 = pneg %p61
        $region42: #{tpu_custom_call.1} parent=39 // pred_check_branch
          %278 = sbr.rel (%p276) target = $region44
        $region43: #{tpu_custom_call.1} parent=39 // pred_region
          %280 = dma.done %s272, 128
        $region44: #{tpu_custom_call.1} parent=39 // pred_fallthru
          _
        %s281 = sand.u32 %s26, 1
        %s282 = scalar_lea.sflag [#allocation10], %s281
        %s283 = sand.u32 %s74, 1
        %s284 = scalar_lea.vmem [#allocation9], %s283
        // Predicated region
        $region45: #{tpu_custom_call.1} parent=39 // pred_check
          %p285 = pneg %p87
        $region46: #{tpu_custom_call.1} parent=39 // pred_check_branch
          %287 = sbr.rel (%p285) target = $region48
        $region47: #{tpu_custom_call.1} parent=39 // pred_region
          %289 = dma.done %s282, 16
        $region48: #{tpu_custom_call.1} parent=39 // pred_fallthru
          _
        // Predicated region
        $region49: #{tpu_custom_call.1} parent=39 // pred_check
          %p290 = pneg %p108
        $region50: #{tpu_custom_call.1} parent=39 // pred_check_branch
          %292 = sbr.rel (%p290) target = $region52
        $region51: #{tpu_custom_call.1} parent=39 // pred_region
          %294 = dma.done [#allocation10], 512
        $region52: #{tpu_custom_call.1} parent=39 // pred_fallthru
          _
        // Predicated region
        $region53: #{tpu_custom_call.1} parent=39 // pred_check
          %p295 = pneg %p129
        $region54: #{tpu_custom_call.1} parent=39 // pred_check_branch
          %297 = sbr.rel (%p295) target = $region56
        $region55: #{tpu_custom_call.1} parent=39 // pred_region
          %299 = dma.done [#allocation13], 512
        $region56: #{tpu_custom_call.1} parent=39 // pred_fallthru
          _
        %s300 = sand.u32 %s48, 1
        %s301 = scalar_lea.sflag [#allocation7], %s300
        %s302 = sand.u32 %s48, 1
        %s303 = smul.addr %s302, 8
        %s304 = scalar_lea.vmem [#allocation6], %s303
        %p305 = pneg %p61
        %p306 = pneg %p58
        %s307 = sand.u32 %s26, 1
        %s308 = scalar_lea.sflag [#allocation10], %s307
        %s309 = sand.u32 %s74, 1
        %s310 = scalar_lea.vmem [#allocation9], %s309
        %p311 = pneg %p87
        %p312 = pneg %p84
        %p313 = pneg %p108
        %p314 = pneg %p105
        %p315 = pneg %p129
        %p316 = pneg %p126
        %p317 = pneg %p150
        %p318 = pneg %p147
        %p319 = pneg %p176
        %p320 = pneg %p173
        %s321 = sand.u32 %s163, 1
        %s322 = scalar_lea.sflag [#allocation8], %s321
        %s323 = sand.u32 %s163, 1
        %s324 = scalar_lea.vmem [#allocation14], %s323
        %p325 = scmp.eq.s32.totalorder %s31, 0
        // Predicated region
        $region57: #{tpu_custom_call.1} parent=39 // pred_check
          %p326 = pneg %p325
        $region58: #{tpu_custom_call.1} parent=39 // pred_check_branch
          %328 = sbr.rel (%p326) target = $region60
        $region59: #{tpu_custom_call.1} parent=39 // pred_region
          %v329 = vld [vmem:[%s284] sm:$0x1]
          %v330 = vld [vmem:[#allocation11] sm:$0xff]
          %v331 = vld [vmem:[#allocation11 + $0x8] sm:$0xff]
          %v332 = vld [vmem:[#allocation11 + $0x10] sm:$0xff]
          %v333 = vld [vmem:[#allocation11 + $0x18] sm:$0xff]
          %vm334 = vcmask 261120
          %v336 = vsel %vm334, %v329, 0
          %338 = vmatpush.msra.mxu0 0.0
          %339 = vmatpush.msra.mxu0 0.0
          %340 = vmatpush.msra.mxu0 0.0
          %341 = vmatpush.msra.mxu0 0.0
          %342 = vmatpush.msra.mxu0 0.0
          %343 = vmatpush.msra.mxu0 0.0
          %344 = vmatpush.msra.mxu0 0.0
          %345 = vmatpush.msra.mxu0 0.0
          %346 = vmatpush.msra.mxu0 0.0
          %347 = vmatpush.msra.mxu0 0.0
          %348 = vmatpush.msra.mxu0 0.0
          %349 = vmatpush.msra.mxu0 0.0
          %350 = vmatpush.msra.mxu0 %v333
          %351 = vmatpush.msra.mxu0 %v332
          %352 = vmatpush.msra.mxu0 %v331
          %353 = vmatpush.msra.mxu0 %v330
          %354 = vmatmul.f32.gmra.mxu0 %v336
          %v355 = vpop.f32.mrf.mxu0
          %v356 = vadd.f32 0.0, %v355
          %357 = vdwg.mxu0
          %vm358 = vcmask 253952
          %359 = vst.msk [vmem:[#allocation2] sm:$0x1] %vm358, %v356
          %vm360 = vcmask 0
          %361 = vst.msk [vmem:[#allocation3] sm:$0x1] %vm360, -inf
          %362 = vst.msk [vmem:[#allocation4] sm:$0x1] %vm360, 0.0
          %363 = vst.msk [vmem:[#allocation5] sm:$0x1] %vm358, 0.0
        $region60: #{tpu_custom_call.1} parent=39 // pred_fallthru
          _
        %v364 = vld [vmem:[%s275] sm:$0xff]
        %v365 = vld [vmem:[#allocation2] sm:$0x1]
        %vm366 = vcmask 261120
        %v368 = vsel %vm366, %v365, 0
        %v371 = vsel %vm366, %v364, 0
        %373 = vmatpush.xpose.msra.mxu0 0.0
        %374 = vmatpush.xpose.msra.mxu0 0.0
        %375 = vmatpush.xpose.msra.mxu0 0.0
        %376 = vmatpush.xpose.msra.mxu0 0.0
        %377 = vmatpush.xpose.msra.mxu0 0.0
        %378 = vmatpush.xpose.msra.mxu0 0.0
        %379 = vmatpush.xpose.msra.mxu0 0.0
        %380 = vmatpush.xpose.msra.mxu0 0.0
        %381 = vmatpush.xpose.msra.mxu0 0.0
        %382 = vmatpush.xpose.msra.mxu0 0.0
        %383 = vmatpush.xpose.msra.mxu0 0.0
        %384 = vmatpush.xpose.msra.mxu0 0.0
        %385 = vmatpush.xpose.msra.mxu0 0.0
        %386 = vmatpush.xpose.msra.mxu0 0.0
        %387 = vmatpush.xpose.msra.mxu0 0.0
        %388 = vmatpush.xpose.msra.mxu0 %v371
        %389 = vmatmul.f32.gmra.mxu0 %v368
        %v390 = vpop.f32.mrf.mxu0
        %v391 = vadd.f32 0.0, %v390
        %392 = vdwg.mxu0
        %v393 = vld [vmem:[#allocation3] sm:$0x1]
        %vm394 = vcmask 57344
        %v395 = vsel %vm394, %v391, -inf
        %396 = vmax.xlane.f32.xlu0 %v395
        %v397 = vpop.xlane.xlu0 %396
        %v398 = vmax.f32 %v393, %v397
        %v399 = vsub.f32 %v393, %v398
        %v400 = vmul.f32 %v399, 1.442695
        %v401 = vpow.pop %v400
        %403 = vset.pattern.permute.xlu0 0
        %404 = vperm.xlu0 %403, %v398
        %v405 = vpop.permute.xlu0 %404
        %v407 = vperm.slane %v405, 0
        %v408 = vsub.f32 %v391, %v407
        %v409 = vmul.f32 %v408, 1.442695
        %v410 = vpow.pop %v409
        %v411 = vld [vmem:[#allocation4] sm:$0x1]
        %v412 = vmul.f32 %v401, %v411
        %v413 = vsel %vm394, %v410, 0.0
        %414 = vadd.xlane.f32.xlu0 %v413
        %v415 = vpop.xlane.xlu0 %414
        %v416 = vadd.f32 %v412, %v415
        %vm417 = vcmask 0
        %418 = vst.msk [vmem:[#allocation4] sm:$0x1] %vm417, %v416
        %v419 = vld [vmem:[#allocation5] sm:$0x1]
        %421 = vset.pattern.permute.xlu0 0
        %422 = vperm.xlu0 %421, %v401
        %v423 = vpop.permute.xlu0 %422
        %v425 = vperm.slane %v423, 0
        %v426 = vmul.f32 %v425, %v419
        %vm427 = vcmask 64512
        %v429 = vsel %vm427, %v410, 0
        %431 = vmatpush.msra.mxu0 0.0
        %432 = vmatpush.msra.mxu0 0.0
        %433 = vmatpush.msra.mxu0 0.0
        %434 = vmatpush.msra.mxu0 0.0
        %435 = vmatpush.msra.mxu0 0.0
        %436 = vmatpush.msra.mxu0 0.0
        %437 = vmatpush.msra.mxu0 0.0
        %438 = vmatpush.msra.mxu0 0.0
        %439 = vmatpush.msra.mxu0 0.0
        %440 = vmatpush.msra.mxu0 0.0
        %441 = vmatpush.msra.mxu0 0.0
        %442 = vmatpush.msra.mxu0 0.0
        %443 = vmatpush.msra.mxu0 0.0
        %444 = vmatpush.msra.mxu0 0.0
        %445 = vmatpush.msra.mxu0 0.0
        %446 = vmatpush.msra.mxu0 %v364
        %447 = vmatmul.f32.gmra.mxu0 %v429
        %v448 = vpop.f32.mrf.mxu0
        %v449 = vadd.f32 0.0, %v448
        %450 = vdwg.mxu0
        %v451 = vadd.f32 %v426, %v449
        %vm452 = vcmask 253952
        %453 = vst.msk [vmem:[#allocation5] sm:$0x1] %vm452, %v451
        %454 = vst.msk [vmem:[#allocation3] sm:$0x1] %vm417, %v398
        %p455 = scmp.eq.s32.totalorder %s31, 1
        // Predicated region
        $region61: #{tpu_custom_call.1} parent=39 // pred_check
          %p456 = pneg %p455
        $region62: #{tpu_custom_call.1} parent=39 // pred_check_branch
          %458 = sbr.rel (%p456) target = $region64
        $region63: #{tpu_custom_call.1} parent=39 // pred_region
          %v459 = vld [vmem:[#allocation5] sm:$0x1]
          %v460 = vld [vmem:[#allocation4] sm:$0x1]
          %v461 = vrcp.pop %v460
          %v462 = vmul.f32 %v460, %v461
          %v463 = vsub.f32 1.0, %v462
          %v464 = vmul.f32 %v461, %v463
          %v465 = vadd.f32 %v461, %v464
          %vm466 = vweird.f32 %v460
          %vm467 = vweird.f32 %v461
          %vm468 = vmor %vm466, %vm467
          %v469 = vsel %vm468, %v461, %v465
          %v470 = vand.u32 2147483647, %v460
          %vm471 = vcmp.eq.f32.partialorder %v470, 8.507059e+37
          %v472 = vand.u32 %v460, 2147483648
          %v473 = vor.u32 1.1754944e-38, %v472
          %v474 = vsel %vm471, %v473, %v469
          %476 = vset.pattern.permute.xlu0 0
          %477 = vperm.xlu0 %476, %v474
          %v478 = vpop.permute.xlu0 %477
          %v480 = vperm.slane %v478, 0
          %v481 = vmul.f32 %v459, %v480
          %v482 = vld [vmem:[#allocation12] sm:$0xff]
          %v483 = vld [vmem:[#allocation12 + $0x8] sm:$0xff]
          %v484 = vld [vmem:[#allocation12 + $0x10] sm:$0xff]
          %v485 = vld [vmem:[#allocation12 + $0x18] sm:$0xff]
          %v486 = vld [vmem:[%s4] sm:$0x1]
          %v488 = vsel %vm366, %v481, 0
          %490 = vmatpush.msra.mxu0 0.0
          %491 = vmatpush.msra.mxu0 0.0
          %492 = vmatpush.msra.mxu0 0.0
          %493 = vmatpush.msra.mxu0 0.0
          %494 = vmatpush.msra.mxu0 0.0
          %495 = vmatpush.msra.mxu0 0.0
          %496 = vmatpush.msra.mxu0 0.0
          %497 = vmatpush.msra.mxu0 0.0
          %498 = vmatpush.msra.mxu0 0.0
          %499 = vmatpush.msra.mxu0 0.0
          %500 = vmatpush.msra.mxu0 0.0
          %501 = vmatpush.msra.mxu0 0.0
          %502 = vmatpush.msra.mxu0 %v485
          %503 = vmatpush.msra.mxu0 %v484
          %504 = vmatpush.msra.mxu0 %v483
          %505 = vmatpush.msra.mxu0 %v482
          %506 = vmatmul.f32.gmra.mxu0 %v488
          %v507 = vpop.f32.mrf.mxu0
          %v508 = vadd.f32 %v486, %v507
          %509 = vdwg.mxu0
          %510 = vst.msk [vmem:[%s324] sm:$0x1] %vm452, %v508
        $region64: #{tpu_custom_call.1} parent=39 // pred_fallthru
          _
        %s511 = sand.u32 %s163, 1
        %s512 = scalar_lea.sflag [#allocation8], %s511
        %s513 = sand.u32 %s163, 1
        %s514 = scalar_lea.vmem [#allocation14], %s513
        // Predicated region
        $region65: #{tpu_custom_call.1} parent=39 // pred_check
          %p515 = pneg %p173
        $region66: #{tpu_custom_call.1} parent=39 // pred_check_branch
          %517 = sbr.rel (%p515) target = $region68
        $region67: #{tpu_custom_call.1} parent=39 // pred_region
          %519 = vsyncadd %s512, 0
          %s520 = scalar_lea.hbm %s5, %s30
          %s522 = sshll.u32 %s514, 4
          %s523 = int_to_ptr.vmem [resolvable:$true] %s522
          %s524 = sshll.u32 %s520, 4
          %s525 = int_to_ptr.hbm [resolvable:$true] %s524
          %527 = dma.vmem_to_hbm [thread:$0]  %s523, 16, %s525, %s512
        $region68: #{tpu_custom_call.1} parent=39 // pred_fallthru
          _
      $region40: #{tpu_custom_call.1} parent=5 // pred_fallthru
        _
      %p528 = scmp.le.s32.totalorder 2, %s21
      // Predicated region
      $region69: #{tpu_custom_call.1} parent=5 // pred_check
        %p529 = pneg %p528
      $region70: #{tpu_custom_call.1} parent=5 // pred_check_branch
        %531 = sbr.rel (%p529) target = $region72
      $region71: #{tpu_custom_call.1} parent=5 // pred_region
        %s532 = ssub.s32 %s21, 2
        // Predicated region
        $region73: #{tpu_custom_call.1} parent=71 // pred_check
          %p533 = pneg %p179
        $region74: #{tpu_custom_call.1} parent=71 // pred_check_branch
          %535 = sbr.rel (%p533) target = $region76
        $region75: #{tpu_custom_call.1} parent=71 // pred_region
          %s536 = sand.u32 %s164, 1
          %s537 = scalar_lea.sflag [#allocation8], %s536
          %s538 = sand.u32 %s164, 1
          %s539 = scalar_lea.vmem [#allocation14], %s538
          %541 = dma.done %s537, 16
        $region76: #{tpu_custom_call.1} parent=71 // pred_fallthru
          _
      $region72: #{tpu_custom_call.1} parent=5 // pred_fallthru
        _
    $region6: #{tpu_custom_call.1} parent=1 // loop_footer
      %s25 = sadd.s32 1, %s21
    $region7: #{tpu_custom_call.1} parent=1 // loop_footer_branch
      %20 = sbr.rel target = $region3
    $region8: #{tpu_custom_call.1} parent=1 // loop_exit
      _
    %542 = vsyncpa [#allocation7], 1
    %s543 = scalar_lea.sflag [#allocation7], 1
    %544 = vsyncpa %s543, 1
    %545 = vsyncpa [#allocation10], 1
    %s546 = scalar_lea.sflag [#allocation10], 1
    %547 = vsyncpa %s546, 1
    %548 = vsyncpa [#allocation13], 1
    %549 = vsyncpa [#allocation8], 1
    %s550 = scalar_lea.sflag [#allocation8], 1
    %551 = vsyncpa %s550, 1

</llo_original>
